<compile_context>
chip_gen: v5e
topology: v5e:2x2
jax: 0.10.0
libtpu: 0.0.40
codegen_flags: <defaults>
</compile_context>

<pallas_src>
import jax
import jax.numpy as jnp
from jax.experimental import pallas as pl
from jax.experimental.pallas import tpu as pltpu

EPS = 1e-5
MXU_DTYPE = jnp.float32   # jnp.bfloat16 on v6e/v7x when tolerance allows


def double_conv_kernel(x_ref, wb1_ref, g1_ref, be1_ref, wb2_ref, g2_ref,
                       be2_ref, agg_ref, aggt_ref, out_ref,
                       xpad_ref, ypad_ref):
    # x_ref   : (N, H, W*Cin)        input slab, lanes = W*Cin
    # wb1_ref : (3*W*Cin,  W*Cout)   banded weight (kx taps + W padding baked in)
    # wb2_ref : (3*W*Cout, W*Cout)
    # g/be    : (1, Cout)            BatchNorm gamma / beta
    # agg_ref : (W*Cout, Cout)       lane-group -> channel fold (tiled identity)
    # aggt_ref: (Cout, W*Cout)       channel -> lane broadcast (its transpose)
    # out_ref : (N*H, W*Cout)        lane-dense output slab
    # xpad_ref: (N, H+2, W*Cin)      VMEM scratch, H-padded input slab
    # ypad_ref: (N, H+2, W*Cout)     VMEM scratch, H-padded intermediate slab
    N, H, WCin = x_ref.shape
    WCout = out_ref.shape[1]
    Cout = g1_ref.shape[1]
    W = WCout // Cout
    inv_m = 1.0 / (N * H * W)          # BN averages over (N, H, W)

    def pad_rows(dst_ref, interior, wc):
        # H padding only: two full-lane zero row stores + one interior copy.
        # Left/right (W) padding is baked into the banded weights -> free.
        dst_ref[:, 0:1, :] = jnp.zeros((N, 1, wc), jnp.float32)
        dst_ref[:, H + 1:H + 2, :] = jnp.zeros((N, 1, wc), jnp.float32)
        dst_ref[:, 1:H + 1, :] = interior

    def shifted_cols(src_ref):
        # (N*H, 3*W*C) column matrix: per batch, the three ky-shifted row
        # blocks of the H-padded slab concatenated along lanes.  Pure loads,
        # no im2col scratch round-trip.
        blocks = []
        for n in range(N):
            blocks.append(jnp.concatenate(
                [src_ref[n, ky:ky + H, :] for ky in range(3)], axis=1))
        return jnp.concatenate(blocks, axis=0)

    def bn_relu(acc, g, be):
        # Training-mode BatchNorm (biased batch variance, eps=1e-5), one-pass
        # stats.  The W-group -> channel fold and the channel -> lane
        # broadcast run as tiny matmuls on the otherwise idle MXU.
        s_lane = jnp.sum(acc, axis=0, keepdims=True)             # (1, W*Cout)
        ss_lane = jnp.sum(acc * acc, axis=0, keepdims=True)      # (1, W*Cout)
        lane_stats = jnp.concatenate([s_lane, ss_lane], axis=0)  # (2, W*Cout)
        ch_stats = jnp.dot(lane_stats, agg_ref[...],
                           preferred_element_type=jnp.float32)   # (2, Cout)
        mean = ch_stats[0:1, :] * inv_m
        var = ch_stats[1:2, :] * inv_m - mean * mean
        scale = g * jax.lax.rsqrt(var + EPS)                     # (1, Cout)
        shift = be - mean * scale
        sc_sh = jnp.concatenate([scale, shift], axis=0)          # (2, Cout)
        sc_sh_lane = jnp.dot(sc_sh, aggt_ref[...],
                             preferred_element_type=jnp.float32)  # (2, W*Cout)
        return jnp.maximum(acc * sc_sh_lane[0:1, :] + sc_sh_lane[1:2, :], 0.0)

    # ---------------- conv1: ONE MXU matmul, K = 3*W*Cin ----------------------
    pad_rows(xpad_ref, x_ref[...], WCin)
    col1 = shifted_cols(xpad_ref).astype(wb1_ref.dtype)
    acc1 = jnp.dot(col1, wb1_ref[...], preferred_element_type=jnp.float32)
    # Conv bias omitted: it cancels exactly under batch-stat BatchNorm.
    y = bn_relu(acc1, g1_ref[...], be1_ref[...])                 # (N*H, W*Cout)

    # ---------------- conv2: ONE MXU matmul, K = 3*W*Cout ---------------------
    pad_rows(ypad_ref, y.reshape(N, H, WCout), WCout)
    col2 = shifted_cols(ypad_ref).astype(wb2_ref.dtype)
    acc2 = jnp.dot(col2, wb2_ref[...], preferred_element_type=jnp.float32)
    z = bn_relu(acc2, g2_ref[...], be2_ref[...])

    # ---------------- single dense, full-lane writeback -----------------------
    out_ref[...] = z


def _banded_weight(w_oihw, W, dtype):
    """torch OIHW (Cout, Cin, 3, 3) -> banded (3*W*Cin, W*Cout) weight.

    Row index = ky*W*Cin + wi*Cin + ci, column index = wo*Cout + co.
    Entry = w[co, ci, ky, wi-wo+1] when 0 <= wi-wo+1 <= 2 else 0, so the kx
    taps and the left/right zero padding live entirely in the weight band.
    """
    Cout, Cin = w_oihw.shape[0], w_oihw.shape[1]
    wt = jnp.transpose(w_oihw, (2, 3, 1, 0))               # (ky, kx, Cin, Cout)
    wi = jnp.arange(W)[:, None]                             # input column
    wo = jnp.arange(W)[None, :]                              # output column
    kx = wi - wo + 1                                         # (W, W)
    valid = (kx >= 0) & (kx <= 2)
    band = wt[:, jnp.clip(kx, 0, 2), :, :]                  # (3, W, W, Cin, Cout)
    band = jnp.where(valid[None, :, :, None, None], band, 0.0)
    band = jnp.transpose(band, (0, 1, 3, 2, 4))             # (ky, wi, ci, wo, co)
    return band.reshape(3 * W * Cin, W * Cout).astype(dtype)


def double_conv(x_nchw, params):
    """x_nchw: (N, Cin, H, W) float32 -> (N, Cout, H, W) float32."""
    x = jnp.transpose(x_nchw, (0, 2, 3, 1)).astype(jnp.float32)   # NHWC
    N, H, W, Cin = x.shape
    Cout = params["w1"].shape[0]
    x_slab = x.reshape(N, H, W * Cin)        # layout plumbing only (free)

    wb1 = _banded_weight(params["w1"], W, MXU_DTYPE)    # (3*W*Cin,  W*Cout)
    wb2 = _banded_weight(params["w2"], W, MXU_DTYPE)    # (3*W*Cout, W*Cout)
    g1 = params["g1"].reshape(1, Cout)
    be1 = params["be1"].reshape(1, Cout)
    g2 = params["g2"].reshape(1, Cout)
    be2 = params["be2"].reshape(1, Cout)
    # params["b1"] / params["b2"] intentionally not passed: a per-channel
    # constant cancels exactly under training-mode (batch-stat) BatchNorm.
    agg = jnp.tile(jnp.eye(Cout, dtype=jnp.float32), (W, 1))    # (W*Cout, Cout)
    aggt = agg.T                                                # (Cout, W*Cout)

    vmem = pl.BlockSpec(memory_space=pltpu.MemorySpace.VMEM)
    out2d = pl.pallas_call(
        double_conv_kernel,
        out_shape=jax.ShapeDtypeStruct((N * H, W * Cout), jnp.float32),
        in_specs=[vmem] * 9,
        out_specs=vmem,
        scratch_shapes=[
            pltpu.VMEM((N, H + 2, W * Cin), jnp.float32),     # H-padded input
            pltpu.VMEM((N, H + 2, W * Cout), jnp.float32),    # H-padded mid
        ],
    )(x_slab, wb1, g1, be1, wb2, g2, be2, agg, aggt)

    out = out2d.reshape(N, H, W, Cout)        # layout plumbing (XLA side)
    return jnp.transpose(out, (0, 3, 1, 2))   # back to NCHW


# -------------------------- pure-JAX reference --------------------------------
def ref_double_conv(x, p):
    def conv(x, w, b):
        y = jax.lax.conv_general_dilated(
            x, w, window_strides=(1, 1), padding=((1, 1), (1, 1)),
            dimension_numbers=("NCHW", "OIHW", "NCHW"))
        return y + b[None, :, None, None]

    def bn_relu(y, g, be):
        m = jnp.mean(y, axis=(0, 2, 3), keepdims=True)
        v = jnp.mean((y - m) ** 2, axis=(0, 2, 3), keepdims=True)
        y = (y - m) * jax.lax.rsqrt(v + EPS)
        y = y * g[None, :, None, None] + be[None, :, None, None]
        return jnp.maximum(y, 0.0)

    y = bn_relu(conv(x, p["w1"], p["b1"]), p["g1"], p["be1"])
    y = bn_relu(conv(y, p["w2"], p["b2"]), p["g2"], p["be2"])
    return y


if __name__ == "__main__":
    N, Cin, Cout, H, W = 2, 4, 8, 16, 16

    key = jax.random.PRNGKey(0)
    ks = jax.random.split(key, 9)
    params = {
        "w1": 0.1 * jax.random.normal(ks[0], (Cout, Cin, 3, 3), jnp.float32),
        "b1": 0.05 * jax.random.normal(ks[1], (Cout,), jnp.float32),
        "g1": 1.0 + 0.1 * jax.random.normal(ks[2], (Cout,), jnp.float32),
        "be1": 0.05 * jax.random.normal(ks[3], (Cout,), jnp.float32),
        "w2": 0.1 * jax.random.normal(ks[4], (Cout, Cout, 3, 3), jnp.float32),
        "b2": 0.05 * jax.random.normal(ks[5], (Cout,), jnp.float32),
        "g2": 1.0 + 0.1 * jax.random.normal(ks[6], (Cout,), jnp.float32),
        "be2": 0.05 * jax.random.normal(ks[7], (Cout,), jnp.float32),
    }
    x = jax.random.normal(ks[8], (N, Cin, H, W), jnp.float32)

    out = double_conv(x, params)
    out = jax.block_until_ready(out)

    ref = jax.block_until_ready(ref_double_conv(x, params))
    assert out.shape == (N, Cout, H, W)
    assert jnp.allclose(out, ref, rtol=1e-3, atol=1e-3), (
        float(jnp.max(jnp.abs(out - ref))))

    print("KERNEL_OK")
</pallas_src>

<mosaic_0001>
module attributes {stable_mosaic.version = 11 : i64} {
  func.func @double_conv_kernel(%arg0: memref<2x16x64xf32, #tpu.memory_space<vmem>>, %arg1: memref<192x128xf32, #tpu.memory_space<vmem>>, %arg2: memref<1x8xf32, #tpu.memory_space<vmem>>, %arg3: memref<1x8xf32, #tpu.memory_space<vmem>>, %arg4: memref<384x128xf32, #tpu.memory_space<vmem>>, %arg5: memref<1x8xf32, #tpu.memory_space<vmem>>, %arg6: memref<1x8xf32, #tpu.memory_space<vmem>>, %arg7: memref<128x8xf32, #tpu.memory_space<vmem>>, %arg8: memref<8x128xf32, #tpu.memory_space<vmem>>, %arg9: memref<32x128xf32, #tpu.memory_space<vmem>>, %arg10: memref<2x18x64xf32, #tpu.memory_space<vmem>>, %arg11: memref<2x18x128xf32, #tpu.memory_space<vmem>>) attributes {dimension_semantics = [], scalar_prefetch = 0 : i64, scratch_operands = 2 : i64, tpu.core_type = #tpu.core_type<tc>} {
    %c0 = arith.constant 0 : index
    %c0_0 = arith.constant 0 : index
    %c0_1 = arith.constant 0 : index
    %0 = vector.load %arg0[%c0, %c0_0, %c0_1] : memref<2x16x64xf32, #tpu.memory_space<vmem>>, vector<2x16x64xf32>
    %cst = arith.constant 0.000000e+00 : f32
    %1 = vector.broadcast %cst : f32 to vector<2x1x64xf32>
    %c0_2 = arith.constant 0 : index
    %c0_3 = arith.constant 0 : index
    %c0_4 = arith.constant 0 : index
    %2 = vector.load %arg10[%c0_2, %c0_3, %c0_4] : memref<2x18x64xf32, #tpu.memory_space<vmem>>, vector<2x1x64xf32>
    tpu.vector_store %arg10[%c0_2, %c0_3, %c0_4], %1 {strides = array<i32>} : memref<2x18x64xf32, #tpu.memory_space<vmem>>, vector<2x1x64xf32>,
    %cst_5 = arith.constant 0.000000e+00 : f32
    %3 = vector.broadcast %cst_5 : f32 to vector<2x1x64xf32>
    %c0_6 = arith.constant 0 : index
    %c17 = arith.constant 17 : index
    %c0_7 = arith.constant 0 : index
    %4 = vector.load %arg10[%c0_6, %c17, %c0_7] : memref<2x18x64xf32, #tpu.memory_space<vmem>>, vector<2x1x64xf32>
    tpu.vector_store %arg10[%c0_6, %c17, %c0_7], %3 {strides = array<i32>} : memref<2x18x64xf32, #tpu.memory_space<vmem>>, vector<2x1x64xf32>,
    %c0_8 = arith.constant 0 : index
    %c1 = arith.constant 1 : index
    %c0_9 = arith.constant 0 : index
    %5 = vector.load %arg10[%c0_8, %c1, %c0_9] : memref<2x18x64xf32, #tpu.memory_space<vmem>>, vector<2x16x64xf32>
    tpu.vector_store %arg10[%c0_8, %c1, %c0_9], %0 {strides = array<i32>} : memref<2x18x64xf32, #tpu.memory_space<vmem>>, vector<2x16x64xf32>,
    %c0_10 = arith.constant 0 : index
    %c0_11 = arith.constant 0 : index
    %c0_12 = arith.constant 0 : index
    %6 = vector.load %arg10[%c0_10, %c0_11, %c0_12] : memref<2x18x64xf32, #tpu.memory_space<vmem>>, vector<1x16x64xf32>
    %7 = vector.shape_cast %6 : vector<1x16x64xf32> to vector<16x64xf32>
    %c0_13 = arith.constant 0 : index
    %c1_14 = arith.constant 1 : index
    %c0_15 = arith.constant 0 : index
    %8 = vector.load %arg10[%c0_13, %c1_14, %c0_15] : memref<2x18x64xf32, #tpu.memory_space<vmem>>, vector<1x16x64xf32>
    %9 = vector.shape_cast %8 : vector<1x16x64xf32> to vector<16x64xf32>
    %c0_16 = arith.constant 0 : index
    %c2 = arith.constant 2 : index
    %c0_17 = arith.constant 0 : index
    %10 = vector.load %arg10[%c0_16, %c2, %c0_17] : memref<2x18x64xf32, #tpu.memory_space<vmem>>, vector<1x16x64xf32>
    %11 = vector.shape_cast %10 : vector<1x16x64xf32> to vector<16x64xf32>
    %12 = tpu.concatenate %7, %9, %11 in 1 : vector<16x64xf32>, vector<16x64xf32>, vector<16x64xf32> -> vector<16x192xf32>
    %c1_18 = arith.constant 1 : index
    %c0_19 = arith.constant 0 : index
    %c0_20 = arith.constant 0 : index
    %13 = vector.load %arg10[%c1_18, %c0_19, %c0_20] : memref<2x18x64xf32, #tpu.memory_space<vmem>>, vector<1x16x64xf32>
    %14 = vector.shape_cast %13 : vector<1x16x64xf32> to vector<16x64xf32>
    %c1_21 = arith.constant 1 : index
    %c1_22 = arith.constant 1 : index
    %c0_23 = arith.constant 0 : index
    %15 = vector.load %arg10[%c1_21, %c1_22, %c0_23] : memref<2x18x64xf32, #tpu.memory_space<vmem>>, vector<1x16x64xf32>
    %16 = vector.shape_cast %15 : vector<1x16x64xf32> to vector<16x64xf32>
    %c1_24 = arith.constant 1 : index
    %c2_25 = arith.constant 2 : index
    %c0_26 = arith.constant 0 : index
    %17 = vector.load %arg10[%c1_24, %c2_25, %c0_26] : memref<2x18x64xf32, #tpu.memory_space<vmem>>, vector<1x16x64xf32>
    %18 = vector.shape_cast %17 : vector<1x16x64xf32> to vector<16x64xf32>
    %19 = tpu.concatenate %14, %16, %18 in 1 : vector<16x64xf32>, vector<16x64xf32>, vector<16x64xf32> -> vector<16x192xf32>
    %20 = tpu.concatenate %12, %19 in 0 : vector<16x192xf32>, vector<16x192xf32> -> vector<32x192xf32>
    %c0_27 = arith.constant 0 : index
    %c0_28 = arith.constant 0 : index
    %21 = vector.load %arg1[%c0_27, %c0_28] : memref<192x128xf32, #tpu.memory_space<vmem>>, vector<192x128xf32>
    %cst_29 = arith.constant dense<0.000000e+00> : vector<32x128xf32>
    %22 = tpu.matmul %20, %21, %cst_29 {dimension_numbers = #tpu.dot_dimension_numbers<[1], [0], [0], [1], [0, 0, 1, 1], [], []>} : vector<32x192xf32>, vector<192x128xf32>, vector<32x128xf32> -> vector<32x128xf32>
    %c0_30 = arith.constant 0 : index
    %c0_31 = arith.constant 0 : index
    %23 = vector.load %arg2[%c0_30, %c0_31] : memref<1x8xf32, #tpu.memory_space<vmem>>, vector<1x8xf32>
    %c0_32 = arith.constant 0 : index
    %c0_33 = arith.constant 0 : index
    %24 = vector.load %arg3[%c0_32, %c0_33] : memref<1x8xf32, #tpu.memory_space<vmem>>, vector<1x8xf32>
    %cst_34 = arith.constant dense<0.000000e+00> : vector<128xf32>
    %25 = vector.multi_reduction <add>, %22, %cst_34 [0] : vector<32x128xf32> to vector<128xf32>
    %26 = vector.shape_cast %25 : vector<128xf32> to vector<1x128xf32>
    %27 = arith.mulf %22, %22 : vector<32x128xf32>
    %cst_35 = arith.constant dense<0.000000e+00> : vector<128xf32>
    %28 = vector.multi_reduction <add>, %27, %cst_35 [0] : vector<32x128xf32> to vector<128xf32>
    %29 = vector.shape_cast %28 : vector<128xf32> to vector<1x128xf32>
    %30 = tpu.concatenate %26, %29 in 0 : vector<1x128xf32>, vector<1x128xf32> -> vector<2x128xf32>
    %c0_36 = arith.constant 0 : index
    %c0_37 = arith.constant 0 : index
    %31 = vector.load %arg7[%c0_36, %c0_37] : memref<128x8xf32, #tpu.memory_space<vmem>>, vector<128x8xf32>
    %cst_38 = arith.constant dense<0.000000e+00> : vector<2x8xf32>
    %32 = tpu.matmul %30, %31, %cst_38 {dimension_numbers = #tpu.dot_dimension_numbers<[1], [0], [0], [1], [0, 0, 1, 1], [], []>} : vector<2x128xf32>, vector<128x8xf32>, vector<2x8xf32> -> vector<2x8xf32>
    %33 = vector.extract_strided_slice %32 {offsets = [0, 0], sizes = [1, 8], strides = [1, 1]} : vector<2x8xf32> to vector<1x8xf32>
    %cst_39 = arith.constant 0.001953125 : f32
    %34 = vector.broadcast %cst_39 : f32 to vector<1x8xf32>
    %35 = arith.mulf %33, %34 : vector<1x8xf32>
    %36 = vector.extract_strided_slice %32 {offsets = [1, 0], sizes = [1, 8], strides = [1, 1]} : vector<2x8xf32> to vector<1x8xf32>
    %cst_40 = arith.constant 0.001953125 : f32
    %37 = vector.broadcast %cst_40 : f32 to vector<1x8xf32>
    %38 = arith.mulf %36, %37 : vector<1x8xf32>
    %39 = arith.mulf %35, %35 : vector<1x8xf32>
    %40 = arith.subf %38, %39 : vector<1x8xf32>
    %cst_41 = arith.constant 9.99999974E-6 : f32
    %41 = vector.broadcast %cst_41 : f32 to vector<1x8xf32>
    %42 = arith.addf %40, %41 : vector<1x8xf32>
    %43 = math.rsqrt %42 : vector<1x8xf32>
    %44 = arith.mulf %23, %43 : vector<1x8xf32>
    %45 = arith.mulf %35, %44 : vector<1x8xf32>
    %46 = arith.subf %24, %45 : vector<1x8xf32>
    %47 = tpu.concatenate %44, %46 in 0 : vector<1x8xf32>, vector<1x8xf32> -> vector<2x8xf32>
    %c0_42 = arith.constant 0 : index
    %c0_43 = arith.constant 0 : index
    %48 = vector.load %arg8[%c0_42, %c0_43] : memref<8x128xf32, #tpu.memory_space<vmem>>, vector<8x128xf32>
    %cst_44 = arith.constant dense<0.000000e+00> : vector<2x128xf32>
    %49 = tpu.matmul %47, %48, %cst_44 {dimension_numbers = #tpu.dot_dimension_numbers<[1], [0], [0], [1], [0, 0, 1, 1], [], []>} : vector<2x8xf32>, vector<8x128xf32>, vector<2x128xf32> -> vector<2x128xf32>
    %50 = vector.extract_strided_slice %49 {offsets = [0, 0], sizes = [1, 128], strides = [1, 1]} : vector<2x128xf32> to vector<1x128xf32>
    %51 = vector.broadcast %50 : vector<1x128xf32> to vector<32x128xf32>
    %52 = arith.mulf %22, %51 : vector<32x128xf32>
    %53 = vector.extract_strided_slice %49 {offsets = [1, 0], sizes = [1, 128], strides = [1, 1]} : vector<2x128xf32> to vector<1x128xf32>
    %54 = vector.broadcast %53 : vector<1x128xf32> to vector<32x128xf32>
    %55 = arith.addf %52, %54 : vector<32x128xf32>
    %cst_45 = arith.constant 0.000000e+00 : f32
    %56 = vector.broadcast %cst_45 : f32 to vector<32x128xf32>
    %57 = arith.maximumf %55, %56 : vector<32x128xf32>
    %58 = vector.shape_cast %57 : vector<32x128xf32> to vector<2x16x128xf32>
    %cst_46 = arith.constant 0.000000e+00 : f32
    %59 = vector.broadcast %cst_46 : f32 to vector<2x1x128xf32>
    %c0_47 = arith.constant 0 : index
    %c0_48 = arith.constant 0 : index
    %c0_49 = arith.constant 0 : index
    %60 = vector.load %arg11[%c0_47, %c0_48, %c0_49] : memref<2x18x128xf32, #tpu.memory_space<vmem>>, vector<2x1x128xf32>
    tpu.vector_store %arg11[%c0_47, %c0_48, %c0_49], %59 {strides = array<i32>} : memref<2x18x128xf32, #tpu.memory_space<vmem>>, vector<2x1x128xf32>,
    %cst_50 = arith.constant 0.000000e+00 : f32
    %61 = vector.broadcast %cst_50 : f32 to vector<2x1x128xf32>
    %c0_51 = arith.constant 0 : index
    %c17_52 = arith.constant 17 : index
    %c0_53 = arith.constant 0 : index
    %62 = vector.load %arg11[%c0_51, %c17_52, %c0_53] : memref<2x18x128xf32, #tpu.memory_space<vmem>>, vector<2x1x128xf32>
    tpu.vector_store %arg11[%c0_51, %c17_52, %c0_53], %61 {strides = array<i32>} : memref<2x18x128xf32, #tpu.memory_space<vmem>>, vector<2x1x128xf32>,
    %c0_54 = arith.constant 0 : index
    %c1_55 = arith.constant 1 : index
    %c0_56 = arith.constant 0 : index
    %63 = vector.load %arg11[%c0_54, %c1_55, %c0_56] : memref<2x18x128xf32, #tpu.memory_space<vmem>>, vector<2x16x128xf32>
    tpu.vector_store %arg11[%c0_54, %c1_55, %c0_56], %58 {strides = array<i32>} : memref<2x18x128xf32, #tpu.memory_space<vmem>>, vector<2x16x128xf32>,
    %c0_57 = arith.constant 0 : index
    %c0_58 = arith.constant 0 : index
    %c0_59 = arith.constant 0 : index
    %64 = vector.load %arg11[%c0_57, %c0_58, %c0_59] : memref<2x18x128xf32, #tpu.memory_space<vmem>>, vector<1x16x128xf32>
    %65 = vector.shape_cast %64 : vector<1x16x128xf32> to vector<16x128xf32>
    %c0_60 = arith.constant 0 : index
    %c1_61 = arith.constant 1 : index
    %c0_62 = arith.constant 0 : index
    %66 = vector.load %arg11[%c0_60, %c1_61, %c0_62] : memref<2x18x128xf32, #tpu.memory_space<vmem>>, vector<1x16x128xf32>
    %67 = vector.shape_cast %66 : vector<1x16x128xf32> to vector<16x128xf32>
    %c0_63 = arith.constant 0 : index
    %c2_64 = arith.constant 2 : index
    %c0_65 = arith.constant 0 : index
    %68 = vector.load %arg11[%c0_63, %c2_64, %c0_65] : memref<2x18x128xf32, #tpu.memory_space<vmem>>, vector<1x16x128xf32>
    %69 = vector.shape_cast %68 : vector<1x16x128xf32> to vector<16x128xf32>
    %70 = tpu.concatenate %65, %67, %69 in 1 : vector<16x128xf32>, vector<16x128xf32>, vector<16x128xf32> -> vector<16x384xf32>
    %c1_66 = arith.constant 1 : index
    %c0_67 = arith.constant 0 : index
    %c0_68 = arith.constant 0 : index
    %71 = vector.load %arg11[%c1_66, %c0_67, %c0_68] : memref<2x18x128xf32, #tpu.memory_space<vmem>>, vector<1x16x128xf32>
    %72 = vector.shape_cast %71 : vector<1x16x128xf32> to vector<16x128xf32>
    %c1_69 = arith.constant 1 : index
    %c1_70 = arith.constant 1 : index
    %c0_71 = arith.constant 0 : index
    %73 = vector.load %arg11[%c1_69, %c1_70, %c0_71] : memref<2x18x128xf32, #tpu.memory_space<vmem>>, vector<1x16x128xf32>
    %74 = vector.shape_cast %73 : vector<1x16x128xf32> to vector<16x128xf32>
    %c1_72 = arith.constant 1 : index
    %c2_73 = arith.constant 2 : index
    %c0_74 = arith.constant 0 : index
    %75 = vector.load %arg11[%c1_72, %c2_73, %c0_74] : memref<2x18x128xf32, #tpu.memory_space<vmem>>, vector<1x16x128xf32>
    %76 = vector.shape_cast %75 : vector<1x16x128xf32> to vector<16x128xf32>
    %77 = tpu.concatenate %72, %74, %76 in 1 : vector<16x128xf32>, vector<16x128xf32>, vector<16x128xf32> -> vector<16x384xf32>
    %78 = tpu.concatenate %70, %77 in 0 : vector<16x384xf32>, vector<16x384xf32> -> vector<32x384xf32>
    %c0_75 = arith.constant 0 : index
    %c0_76 = arith.constant 0 : index
    %79 = vector.load %arg4[%c0_75, %c0_76] : memref<384x128xf32, #tpu.memory_space<vmem>>, vector<384x128xf32>
    %cst_77 = arith.constant dense<0.000000e+00> : vector<32x128xf32>
    %80 = tpu.matmul %78, %79, %cst_77 {dimension_numbers = #tpu.dot_dimension_numbers<[1], [0], [0], [1], [0, 0, 1, 1], [], []>} : vector<32x384xf32>, vector<384x128xf32>, vector<32x128xf32> -> vector<32x128xf32>
    %c0_78 = arith.constant 0 : index
    %c0_79 = arith.constant 0 : index
    %81 = vector.load %arg5[%c0_78, %c0_79] : memref<1x8xf32, #tpu.memory_space<vmem>>, vector<1x8xf32>
    %c0_80 = arith.constant 0 : index
    %c0_81 = arith.constant 0 : index
    %82 = vector.load %arg6[%c0_80, %c0_81] : memref<1x8xf32, #tpu.memory_space<vmem>>, vector<1x8xf32>
    %cst_82 = arith.constant dense<0.000000e+00> : vector<128xf32>
    %83 = vector.multi_reduction <add>, %80, %cst_82 [0] : vector<32x128xf32> to vector<128xf32>
    %84 = vector.shape_cast %83 : vector<128xf32> to vector<1x128xf32>
    %85 = arith.mulf %80, %80 : vector<32x128xf32>
    %cst_83 = arith.constant dense<0.000000e+00> : vector<128xf32>
    %86 = vector.multi_reduction <add>, %85, %cst_83 [0] : vector<32x128xf32> to vector<128xf32>
    %87 = vector.shape_cast %86 : vector<128xf32> to vector<1x128xf32>
    %88 = tpu.concatenate %84, %87 in 0 : vector<1x128xf32>, vector<1x128xf32> -> vector<2x128xf32>
    %c0_84 = arith.constant 0 : index
    %c0_85 = arith.constant 0 : index
    %89 = vector.load %arg7[%c0_84, %c0_85] : memref<128x8xf32, #tpu.memory_space<vmem>>, vector<128x8xf32>
    %cst_86 = arith.constant dense<0.000000e+00> : vector<2x8xf32>
    %90 = tpu.matmul %88, %89, %cst_86 {dimension_numbers = #tpu.dot_dimension_numbers<[1], [0], [0], [1], [0, 0, 1, 1], [], []>} : vector<2x128xf32>, vector<128x8xf32>, vector<2x8xf32> -> vector<2x8xf32>
    %91 = vector.extract_strided_slice %90 {offsets = [0, 0], sizes = [1, 8], strides = [1, 1]} : vector<2x8xf32> to vector<1x8xf32>
    %cst_87 = arith.constant 0.001953125 : f32
    %92 = vector.broadcast %cst_87 : f32 to vector<1x8xf32>
    %93 = arith.mulf %91, %92 : vector<1x8xf32>
    %94 = vector.extract_strided_slice %90 {offsets = [1, 0], sizes = [1, 8], strides = [1, 1]} : vector<2x8xf32> to vector<1x8xf32>
    %cst_88 = arith.constant 0.001953125 : f32
    %95 = vector.broadcast %cst_88 : f32 to vector<1x8xf32>
    %96 = arith.mulf %94, %95 : vector<1x8xf32>
    %97 = arith.mulf %93, %93 : vector<1x8xf32>
    %98 = arith.subf %96, %97 : vector<1x8xf32>
    %cst_89 = arith.constant 9.99999974E-6 : f32
    %99 = vector.broadcast %cst_89 : f32 to vector<1x8xf32>
    %100 = arith.addf %98, %99 : vector<1x8xf32>
    %101 = math.rsqrt %100 : vector<1x8xf32>
    %102 = arith.mulf %81, %101 : vector<1x8xf32>
    %103 = arith.mulf %93, %102 : vector<1x8xf32>
    %104 = arith.subf %82, %103 : vector<1x8xf32>
    %105 = tpu.concatenate %102, %104 in 0 : vector<1x8xf32>, vector<1x8xf32> -> vector<2x8xf32>
    %c0_90 = arith.constant 0 : index
    %c0_91 = arith.constant 0 : index
    %106 = vector.load %arg8[%c0_90, %c0_91] : memref<8x128xf32, #tpu.memory_space<vmem>>, vector<8x128xf32>
    %cst_92 = arith.constant dense<0.000000e+00> : vector<2x128xf32>
    %107 = tpu.matmul %105, %106, %cst_92 {dimension_numbers = #tpu.dot_dimension_numbers<[1], [0], [0], [1], [0, 0, 1, 1], [], []>} : vector<2x8xf32>, vector<8x128xf32>, vector<2x128xf32> -> vector<2x128xf32>
    %108 = vector.extract_strided_slice %107 {offsets = [0, 0], sizes = [1, 128], strides = [1, 1]} : vector<2x128xf32> to vector<1x128xf32>
    %109 = vector.broadcast %108 : vector<1x128xf32> to vector<32x128xf32>
    %110 = arith.mulf %80, %109 : vector<32x128xf32>
    %111 = vector.extract_strided_slice %107 {offsets = [1, 0], sizes = [1, 128], strides = [1, 1]} : vector<2x128xf32> to vector<1x128xf32>
    %112 = vector.broadcast %111 : vector<1x128xf32> to vector<32x128xf32>
    %113 = arith.addf %110, %112 : vector<32x128xf32>
    %cst_93 = arith.constant 0.000000e+00 : f32
    %114 = vector.broadcast %cst_93 : f32 to vector<32x128xf32>
    %115 = arith.maximumf %113, %114 : vector<32x128xf32>
    %c0_94 = arith.constant 0 : index
    %c0_95 = arith.constant 0 : index
    %116 = vector.load %arg9[%c0_94, %c0_95] : memref<32x128xf32, #tpu.memory_space<vmem>>, vector<32x128xf32>
    tpu.vector_store %arg9[%c0_94, %c0_95], %115 {strides = array<i32>} : memref<32x128xf32, #tpu.memory_space<vmem>>, vector<32x128xf32>,
    return
  }
}

</mosaic_0001>

<llo_original>
// kernel: tpu_custom_call.1
$region0: #{tpu_custom_call.1}
  #allocation0 [shape = 'u32[]', space=smem, size = 0x4, offset = 0x4, fixed_abs, tag = 'smem constant byte address 0x4 - core index']
  #allocation1 [shape = 'u32[72,128]{1,0:T(1,128)}', space=vmem, size = 0x9000, scoped, tag = 'internal scratch']
  #allocation2 [shape = 'f32[2,18,64]{2,1,0:T(8,128)}', space=vmem, size = 0x6000, scoped, tag = 'scratch operand']
  #allocation3 [shape = 'f32[2,18,128]{2,1,0:T(8,128)}', space=vmem, size = 0x6000, scoped, tag = 'scratch operand']
  %s0 = inlined_call_operand.vmem [shape: f32[2,16,64], index: 0, kind: input, shape index: {}]
  %s1 = inlined_call_operand.hbm [shape: f32[192,128], index: 1, kind: input, shape index: {}]
  %s2 = inlined_call_operand.vmem [shape: f32[1,8], index: 2, kind: input, shape index: {}]
  %s3 = inlined_call_operand.vmem [shape: f32[1,8], index: 3, kind: input, shape index: {}]
  %s4 = inlined_call_operand.hbm [shape: f32[384,128], index: 4, kind: input, shape index: {}]
  %s5 = inlined_call_operand.vmem [shape: f32[1,8], index: 5, kind: input, shape index: {}]
  %s6 = inlined_call_operand.vmem [shape: f32[1,8], index: 6, kind: input, shape index: {}]
  %s7 = inlined_call_operand.vmem [shape: f32[128,8], index: 7, kind: input, shape index: {}]
  %s8 = inlined_call_operand.vmem [shape: f32[8,128], index: 8, kind: input, shape index: {}]
  %s9 = inlined_call_operand.hbm [shape: f32[32,128], index: 9, kind: output, shape index: {}]
  %s10 = sld [smem:[#allocation0]]
  $region54: #{tpu_custom_call.1} parent=0
    _
  %s12 = ssub.s32 1, %s10
  %s13 = scalar_select 0, %s12, %s10
  $region1: #{tpu_custom_call.1} parent=0
    #allocation4 [shape = 'u8[98304]{0}', space=vmem, size = 0x18000, scoped, tag = 'input window, operand 1, single buffered']
    #allocation5 [shape = 's32[1]{0}', space=sflag, size = 0x4, scoped, tag = 'scoped memory for tpu_custom_call.1']
    #allocation6 [shape = 's32[1]{0}', space=sflag, size = 0x4, scoped, tag = 'scoped memory for tpu_custom_call.1']
    #allocation7 [shape = 'u8[196608]{0}', space=vmem, size = 0x30000, scoped, tag = 'input window, operand 4, single buffered']
    #allocation8 [shape = 's32[1]{0}', space=sflag, size = 0x4, scoped, tag = 'scoped memory for tpu_custom_call.1']
    #allocation9 [shape = 'u8[16384]{0}', space=vmem, size = 0x4000, scoped, tag = 'output window, operand 0, single buffered']
    %14 = vsyncpa [#allocation5], 0
    %15 = vsyncpa [#allocation8], 0
    %16 = vsyncpa [#allocation6], 0
    // Predicated region
    $region2: #{tpu_custom_call.1} parent=1 // pred_check
      _
    $region3: #{tpu_custom_call.1} parent=1 // pred_check_branch
      %18 = sbr.rel (0) target = $region5
    $region4: #{tpu_custom_call.1} parent=1 // pred_region
      _
    $region5: #{tpu_custom_call.1} parent=1 // pred_fallthru
      _
    // Predicated region
    $region6: #{tpu_custom_call.1} parent=1 // pred_check
      _
    $region7: #{tpu_custom_call.1} parent=1 // pred_check_branch
      %20 = sbr.rel (0) target = $region9
    $region8: #{tpu_custom_call.1} parent=1 // pred_region
      %22 = vsyncadd [#allocation5], 0
      %s23 = sshll.u32 %s1, 4
      %s24 = int_to_ptr.hbm [resolvable:$true] %s23
      %s25 = sshll.u32 [#allocation4], 4
      %s26 = int_to_ptr.vmem [resolvable:$true] %s25
      %31 = dma.hbm_to_vmem [thread:$0]  %s24, 3072, %s26, [#allocation5], 128, 128, 8
    $region9: #{tpu_custom_call.1} parent=1 // pred_fallthru
      _
    // Predicated region
    $region10: #{tpu_custom_call.1} parent=1 // pred_check
      _
    $region11: #{tpu_custom_call.1} parent=1 // pred_check_branch
      %33 = sbr.rel (0) target = $region13
    $region12: #{tpu_custom_call.1} parent=1 // pred_region
      _
    $region13: #{tpu_custom_call.1} parent=1 // pred_fallthru
      _
    // Predicated region
    $region14: #{tpu_custom_call.1} parent=1 // pred_check
      _
    $region15: #{tpu_custom_call.1} parent=1 // pred_check_branch
      %35 = sbr.rel (0) target = $region17
    $region16: #{tpu_custom_call.1} parent=1 // pred_region
      _
    $region17: #{tpu_custom_call.1} parent=1 // pred_fallthru
      _
    // Predicated region
    $region18: #{tpu_custom_call.1} parent=1 // pred_check
      _
    $region19: #{tpu_custom_call.1} parent=1 // pred_check_branch
      %37 = sbr.rel (0) target = $region21
    $region20: #{tpu_custom_call.1} parent=1 // pred_region
      %39 = vsyncadd [#allocation8], 0
      %s40 = sshll.u32 %s4, 4
      %s41 = int_to_ptr.hbm [resolvable:$true] %s40
      %s42 = sshll.u32 [#allocation7], 4
      %s43 = int_to_ptr.vmem [resolvable:$true] %s42
      %48 = dma.hbm_to_vmem [thread:$0]  %s41, 6144, %s43, [#allocation8], 128, 128, 8
    $region21: #{tpu_custom_call.1} parent=1 // pred_fallthru
      _
    // Predicated region
    $region22: #{tpu_custom_call.1} parent=1 // pred_check
      _
    $region23: #{tpu_custom_call.1} parent=1 // pred_check_branch
      %50 = sbr.rel (0) target = $region25
    $region24: #{tpu_custom_call.1} parent=1 // pred_region
      _
    $region25: #{tpu_custom_call.1} parent=1 // pred_fallthru
      _
    // Predicated region
    $region26: #{tpu_custom_call.1} parent=1 // pred_check
      _
    $region27: #{tpu_custom_call.1} parent=1 // pred_check_branch
      %52 = sbr.rel (0) target = $region29
    $region28: #{tpu_custom_call.1} parent=1 // pred_region
      _
    $region29: #{tpu_custom_call.1} parent=1 // pred_fallthru
      _
    // Predicated region
    $region30: #{tpu_custom_call.1} parent=1 // pred_check
      _
    $region31: #{tpu_custom_call.1} parent=1 // pred_check_branch
      %54 = sbr.rel (0) target = $region33
    $region32: #{tpu_custom_call.1} parent=1 // pred_region
      _
    $region33: #{tpu_custom_call.1} parent=1 // pred_fallthru
      _
    // Predicated region
    $region34: #{tpu_custom_call.1} parent=1 // pred_check
      _
    $region35: #{tpu_custom_call.1} parent=1 // pred_check_branch
      %56 = sbr.rel (0) target = $region37
    $region36: #{tpu_custom_call.1} parent=1 // pred_region
      _
    $region37: #{tpu_custom_call.1} parent=1 // pred_fallthru
      _
    // Predicated region
    $region38: #{tpu_custom_call.1} parent=1 // pred_check
      _
    $region39: #{tpu_custom_call.1} parent=1 // pred_check_branch
      %58 = sbr.rel (0) target = $region41
    $region40: #{tpu_custom_call.1} parent=1 // pred_region
      %60 = dma.done [#allocation5], 3072
    $region41: #{tpu_custom_call.1} parent=1 // pred_fallthru
      _
    // Predicated region
    $region42: #{tpu_custom_call.1} parent=1 // pred_check
      _
    $region43: #{tpu_custom_call.1} parent=1 // pred_check_branch
      %62 = sbr.rel (0) target = $region45
    $region44: #{tpu_custom_call.1} parent=1 // pred_region
      %64 = dma.done [#allocation8], 6144
    $region45: #{tpu_custom_call.1} parent=1 // pred_fallthru
      _
    %v65 = vld [vmem:[%s0] sm:$0xff]
    %v66 = vld [vmem:[%s0 + $0x8] sm:$0xff]
    %v67 = vld [vmem:[%s0 + $0x10] sm:$0xff]
    %v68 = vld [vmem:[%s0 + $0x18] sm:$0xff]
    %vm69 = vcmask 516096
    %70 = vst.msk [vmem:[#allocation2] sm:$0x1] %vm69, 0.0
    %71 = vst.msk [vmem:[#allocation2 + $0x18] sm:$0x1] %vm69, 0.0
    %72 = vst.msk [vmem:[#allocation2 + $0x11] sm:$0x1] %vm69, 0.0
    %73 = vst.msk [vmem:[#allocation2 + $0x29] sm:$0x1] %vm69, 0.0
    %vm74 = vcmask 523264
    %75 = vst.msk [vmem:[#allocation2 + $0x1] sm:$0xff] %vm74, %v65
    %76 = vst.msk [vmem:[#allocation2 + $0x9] sm:$0xff] %vm74, %v66
    %77 = vst.msk [vmem:[#allocation2 + $0x19] sm:$0xff] %vm74, %v67
    %78 = vst.msk [vmem:[#allocation2 + $0x21] sm:$0xff] %vm74, %v68
    %v79 = vld [vmem:[#allocation2] sm:$0xff]
    %v80 = vld [vmem:[#allocation2 + $0x8] sm:$0xff]
    %v81 = vld [vmem:[#allocation2 + $0x1] sm:$0xff]
    %v82 = vld [vmem:[#allocation2 + $0x9] sm:$0xff]
    %v83 = vld [vmem:[#allocation2 + $0x2] sm:$0xff]
    %v84 = vld [vmem:[#allocation2 + $0xa] sm:$0xff]
    %87 = vrot.lane.b32.xlu0 %v81, 64
    %v88 = vpop.permute.xlu0 %87
    %89 = vrot.lane.b32.xlu0 %v82, 64
    %v90 = vpop.permute.xlu0 %89
    %v93 = vsel %vm74, %v79, %v88
    %v94 = vsel %vm74, %v80, %v90
    %s95 = scalar_lea.vmem [#allocation2], 24
    %v96 = vld [vmem:[%s95] sm:$0xff]
    %v97 = vld [vmem:[%s95 + $0x8] sm:$0xff]
    %v98 = vld [vmem:[%s95 + $0x1] sm:$0xff]
    %v99 = vld [vmem:[%s95 + $0x9] sm:$0xff]
    %v100 = vld [vmem:[%s95 + $0x2] sm:$0xff]
    %v101 = vld [vmem:[%s95 + $0xa] sm:$0xff]
    %104 = vrot.lane.b32.xlu0 %v98, 64
    %v105 = vpop.permute.xlu0 %104
    %106 = vrot.lane.b32.xlu0 %v99, 64
    %v107 = vpop.permute.xlu0 %106
    %v110 = vsel %vm74, %v96, %v105
    %v111 = vsel %vm74, %v97, %v107
    %v112 = vld [vmem:[#allocation4] sm:$0xff]
    %v113 = vld [vmem:[#allocation4 + $0x8] sm:$0xff]
    %v114 = vld [vmem:[#allocation4 + $0x10] sm:$0xff]
    %v115 = vld [vmem:[#allocation4 + $0x18] sm:$0xff]
    %v116 = vld [vmem:[#allocation4 + $0x20] sm:$0xff]
    %v117 = vld [vmem:[#allocation4 + $0x28] sm:$0xff]
    %v118 = vld [vmem:[#allocation4 + $0x30] sm:$0xff]
    %v119 = vld [vmem:[#allocation4 + $0x38] sm:$0xff]
    %v120 = vld [vmem:[#allocation4 + $0x40] sm:$0xff]
    %v121 = vld [vmem:[#allocation4 + $0x48] sm:$0xff]
    %v122 = vld [vmem:[#allocation4 + $0x50] sm:$0xff]
    %v123 = vld [vmem:[#allocation4 + $0x58] sm:$0xff]
    %v124 = vld [vmem:[#allocation4 + $0x60] sm:$0xff]
    %v125 = vld [vmem:[#allocation4 + $0x68] sm:$0xff]
    %v126 = vld [vmem:[#allocation4 + $0x70] sm:$0xff]
    %v127 = vld [vmem:[#allocation4 + $0x78] sm:$0xff]
    %v128 = vld [vmem:[#allocation4 + $0x80] sm:$0xff]
    %v129 = vld [vmem:[#allocation4 + $0x88] sm:$0xff]
    %v130 = vld [vmem:[#allocation4 + $0x90] sm:$0xff]
    %v131 = vld [vmem:[#allocation4 + $0x98] sm:$0xff]
    %v132 = vld [vmem:[#allocation4 + $0xa0] sm:$0xff]
    %v133 = vld [vmem:[#allocation4 + $0xa8] sm:$0xff]
    %v134 = vld [vmem:[#allocation4 + $0xb0] sm:$0xff]
    %v135 = vld [vmem:[#allocation4 + $0xb8] sm:$0xff]
    %v137 = vsel %vm74, %v83, 0
    %v140 = vsel %vm74, %v84, 0
    %v143 = vsel %vm74, %v100, 0
    %v146 = vsel %vm74, %v101, 0
    %148 = vmatpush.msra.mxu0 %v127
    %149 = vmatpush.msra.mxu0 %v126
    %150 = vmatpush.msra.mxu0 %v125
    %151 = vmatpush.msra.mxu0 %v124
    %152 = vmatpush.msra.mxu0 %v123
    %153 = vmatpush.msra.mxu0 %v122
    %154 = vmatpush.msra.mxu0 %v121
    %155 = vmatpush.msra.mxu0 %v120
    %156 = vmatpush.msra.mxu0 %v119
    %157 = vmatpush.msra.mxu0 %v118
    %158 = vmatpush.msra.mxu0 %v117
    %159 = vmatpush.msra.mxu0 %v116
    %160 = vmatpush.msra.mxu0 %v115
    %161 = vmatpush.msra.mxu0 %v114
    %162 = vmatpush.msra.mxu0 %v113
    %163 = vmatpush.msra.mxu0 %v112
    %164 = vmatmul.f32.gmra.mxu0 %v93
    %v165 = vpop.f32.mrf.mxu0
    %v166 = vadd.f32 0.0, %v165
    %167 = vmatmul.f32.gmra.mxu0 %v94
    %v168 = vpop.f32.mrf.mxu0
    %v169 = vadd.f32 0.0, %v168
    %170 = vmatmul.f32.gmra.mxu0 %v110
    %v171 = vpop.f32.mrf.mxu0
    %v172 = vadd.f32 0.0, %v171
    %173 = vmatmul.f32.gmra.mxu0 %v111
    %v174 = vpop.f32.mrf.mxu0
    %v175 = vadd.f32 0.0, %v174
    %176 = vdwg.mxu0
    %177 = vmatpush.msra.mxu0 0.0
    %178 = vmatpush.msra.mxu0 0.0
    %179 = vmatpush.msra.mxu0 0.0
    %180 = vmatpush.msra.mxu0 0.0
    %181 = vmatpush.msra.mxu0 0.0
    %182 = vmatpush.msra.mxu0 0.0
    %183 = vmatpush.msra.mxu0 0.0
    %184 = vmatpush.msra.mxu0 0.0
    %185 = vmatpush.msra.mxu0 %v135
    %186 = vmatpush.msra.mxu0 %v134
    %187 = vmatpush.msra.mxu0 %v133
    %188 = vmatpush.msra.mxu0 %v132
    %189 = vmatpush.msra.mxu0 %v131
    %190 = vmatpush.msra.mxu0 %v130
    %191 = vmatpush.msra.mxu0 %v129
    %192 = vmatpush.msra.mxu0 %v128
    %193 = vmatmul.f32.gmra.mxu0 %v137
    %v194 = vpop.f32.mrf.mxu0
    %v195 = vadd.f32 %v166, %v194
    %196 = vmatmul.f32.gmra.mxu0 %v140
    %v197 = vpop.f32.mrf.mxu0
    %v198 = vadd.f32 %v169, %v197
    %199 = vmatmul.f32.gmra.mxu0 %v143
    %v200 = vpop.f32.mrf.mxu0
    %v201 = vadd.f32 %v172, %v200
    %202 = vmatmul.f32.gmra.mxu0 %v146
    %v203 = vpop.f32.mrf.mxu0
    %v204 = vadd.f32 %v175, %v203
    %205 = vdwg.mxu0
    %v206 = vld [vmem:[%s2] sm:$0x1]
    %v207 = vld [vmem:[%s3] sm:$0x1]
    %v208 = vadd.f32 %v195, %v198
    %v209 = vadd.f32 %v208, %v201
    %v210 = vadd.f32 %v209, %v204
    %v211 = vrot.slane %v210, 4
    %v212 = vadd.f32 %v210, %v211
    %v213 = vrot.slane %v212, 2
    %v214 = vadd.f32 %v212, %v213
    %v215 = vrot.slane %v214, 1
    %v216 = vadd.f32 %v214, %v215
    %v217 = vmul.f32 %v195, %v195
    %v218 = vmul.f32 %v198, %v198
    %v219 = vmul.f32 %v201, %v201
    %v220 = vmul.f32 %v204, %v204
    %v221 = vadd.f32 %v217, %v218
    %v222 = vadd.f32 %v221, %v219
    %v223 = vadd.f32 %v222, %v220
    %v224 = vrot.slane %v223, 4
    %v225 = vadd.f32 %v223, %v224
    %v226 = vrot.slane %v225, 2
    %v227 = vadd.f32 %v225, %v226
    %v228 = vrot.slane %v227, 1
    %v229 = vadd.f32 %v227, %v228
    %vm230 = vcmask 1040384
    %v231 = vsel %vm230, %v216, %v229
    %v232 = vld [vmem:[%s7] sm:$0xff]
    %v233 = vld [vmem:[%s7 + $0x8] sm:$0xff]
    %v234 = vld [vmem:[%s7 + $0x10] sm:$0xff]
    %v235 = vld [vmem:[%s7 + $0x18] sm:$0xff]
    %v236 = vld [vmem:[%s7 + $0x20] sm:$0xff]
    %v237 = vld [vmem:[%s7 + $0x28] sm:$0xff]
    %v238 = vld [vmem:[%s7 + $0x30] sm:$0xff]
    %v239 = vld [vmem:[%s7 + $0x38] sm:$0xff]
    %v240 = vld [vmem:[%s7 + $0x40] sm:$0xff]
    %v241 = vld [vmem:[%s7 + $0x48] sm:$0xff]
    %v242 = vld [vmem:[%s7 + $0x50] sm:$0xff]
    %v243 = vld [vmem:[%s7 + $0x58] sm:$0xff]
    %v244 = vld [vmem:[%s7 + $0x60] sm:$0xff]
    %v245 = vld [vmem:[%s7 + $0x68] sm:$0xff]
    %v246 = vld [vmem:[%s7 + $0x70] sm:$0xff]
    %v247 = vld [vmem:[%s7 + $0x78] sm:$0xff]
    %248 = vmatpush.msra.mxu0 %v247
    %249 = vmatpush.msra.mxu0 %v246
    %250 = vmatpush.msra.mxu0 %v245
    %251 = vmatpush.msra.mxu0 %v244
    %252 = vmatpush.msra.mxu0 %v243
    %253 = vmatpush.msra.mxu0 %v242
    %254 = vmatpush.msra.mxu0 %v241
    %255 = vmatpush.msra.mxu0 %v240
    %256 = vmatpush.msra.mxu0 %v239
    %257 = vmatpush.msra.mxu0 %v238
    %258 = vmatpush.msra.mxu0 %v237
    %259 = vmatpush.msra.mxu0 %v236
    %260 = vmatpush.msra.mxu0 %v235
    %261 = vmatpush.msra.mxu0 %v234
    %262 = vmatpush.msra.mxu0 %v233
    %263 = vmatpush.msra.mxu0 %v232
    %264 = vmatmul.f32.gmra.mxu0 %v231
    %v265 = vpop.f32.mrf.mxu0
    %v266 = vadd.f32 0.0, %v265
    %267 = vdwg.mxu0
    %v268 = vmul.f32 %v266, 0.001953125
    %v269 = vmul.f32 %v268, %v268
    %v271 = vrot.slane %v269, 7
    %v273 = vsub.f32 %v268, %v271
    %v274 = vadd.f32 %v273, 1e-05
    %v275 = vrsqrt.pop %v274
    %v276 = vmul.f32 %v275, %v274
    %v277 = vmul.f32 %v276, %v275
    %v278 = vmul.f32 0.5, %v277
    %v279 = vsub.f32 1.5, %v278
    %v280 = vmul.f32 %v275, %v279
    %vm281 = vweird.f32 %v274
    %vm282 = vweird.f32 %v275
    %vm283 = vmor %vm281, %vm282
    %v284 = vsel %vm283, %v275, %v280
    %286 = vst [vmem:[#allocation1] sm:$0xff] %v284
    %s287 = scalar_lea.vmem [#allocation1], 1
    %v288 = vld [vmem:[%s287] ss:$9 sm:$0xff]
    %v290 = vmul.f32 %v206, %v288
    %v291 = vmul.f32 %v268, %v290
    %v292 = vsub.f32 %v207, %v291
    %v294 = vperm.slane %v292, 0
    %v296 = vsel %vm230, %v290, %v294
    %v297 = vld [vmem:[%s8] sm:$0xff]
    %vm298 = vcmask 64512
    %v300 = vsel %vm298, %v296, 0
    %302 = vmatpush.msra.mxu0 0.0
    %303 = vmatpush.msra.mxu0 0.0
    %304 = vmatpush.msra.mxu0 0.0
    %305 = vmatpush.msra.mxu0 0.0
    %306 = vmatpush.msra.mxu0 0.0
    %307 = vmatpush.msra.mxu0 0.0
    %308 = vmatpush.msra.mxu0 0.0
    %309 = vmatpush.msra.mxu0 0.0
    %310 = vmatpush.msra.mxu0 0.0
    %311 = vmatpush.msra.mxu0 0.0
    %312 = vmatpush.msra.mxu0 0.0
    %313 = vmatpush.msra.mxu0 0.0
    %314 = vmatpush.msra.mxu0 0.0
    %315 = vmatpush.msra.mxu0 0.0
    %316 = vmatpush.msra.mxu0 0.0
    %317 = vmatpush.msra.mxu0 %v297
    %318 = vmatmul.f32.gmra.mxu0 %v300
    %v319 = vpop.f32.mrf.mxu0
    %v320 = vadd.f32 0.0, %v319
    %321 = vdwg.mxu0
    %v322 = vperm.slane %v320, 0
    %v323 = vmul.f32 %v195, %v322
    %v324 = vmul.f32 %v198, %v322
    %v325 = vmul.f32 %v201, %v322
    %v326 = vmul.f32 %v204, %v322
    %v327 = vperm.slane %v320, 1
    %v328 = vadd.f32 %v323, %v327
    %v329 = vadd.f32 %v324, %v327
    %v330 = vadd.f32 %v325, %v327
    %v331 = vadd.f32 %v326, %v327
    %v332 = vmax.f32 %v328, 0.0
    %v333 = vmax.f32 %v329, 0.0
    %v334 = vmax.f32 %v330, 0.0
    %v335 = vmax.f32 %v331, 0.0
    %336 = vst [vmem:[#allocation3] sm:$0x1] 0.0
    %337 = vst [vmem:[#allocation3 + $0x18] sm:$0x1] 0.0
    %338 = vst [vmem:[#allocation3 + $0x11] sm:$0x1] 0.0
    %339 = vst [vmem:[#allocation3 + $0x29] sm:$0x1] 0.0
    %340 = vst [vmem:[#allocation3 + $0x1] sm:$0xff] %v332
    %341 = vst [vmem:[#allocation3 + $0x9] sm:$0xff] %v333
    %342 = vst [vmem:[#allocation3 + $0x19] sm:$0xff] %v334
    %343 = vst [vmem:[#allocation3 + $0x21] sm:$0xff] %v335
    %v344 = vld [vmem:[#allocation3] sm:$0xff]
    %v345 = vld [vmem:[#allocation3 + $0x8] sm:$0xff]
    %v346 = vld [vmem:[#allocation3 + $0x1] sm:$0xff]
    %v347 = vld [vmem:[#allocation3 + $0x9] sm:$0xff]
    %v348 = vld [vmem:[#allocation3 + $0x2] sm:$0xff]
    %v349 = vld [vmem:[#allocation3 + $0xa] sm:$0xff]
    %s350 = scalar_lea.vmem [#allocation3], 24
    %v351 = vld [vmem:[%s350] sm:$0xff]
    %v352 = vld [vmem:[%s350 + $0x8] sm:$0xff]
    %v353 = vld [vmem:[%s350 + $0x1] sm:$0xff]
    %v354 = vld [vmem:[%s350 + $0x9] sm:$0xff]
    %v355 = vld [vmem:[%s350 + $0x2] sm:$0xff]
    %v356 = vld [vmem:[%s350 + $0xa] sm:$0xff]
    %v357 = vld [vmem:[#allocation7] sm:$0xff]
    %v358 = vld [vmem:[#allocation7 + $0x8] sm:$0xff]
    %v359 = vld [vmem:[#allocation7 + $0x10] sm:$0xff]
    %v360 = vld [vmem:[#allocation7 + $0x18] sm:$0xff]
    %v361 = vld [vmem:[#allocation7 + $0x20] sm:$0xff]
    %v362 = vld [vmem:[#allocation7 + $0x28] sm:$0xff]
    %v363 = vld [vmem:[#allocation7 + $0x30] sm:$0xff]
    %v364 = vld [vmem:[#allocation7 + $0x38] sm:$0xff]
    %v365 = vld [vmem:[#allocation7 + $0x40] sm:$0xff]
    %v366 = vld [vmem:[#allocation7 + $0x48] sm:$0xff]
    %v367 = vld [vmem:[#allocation7 + $0x50] sm:$0xff]
    %v368 = vld [vmem:[#allocation7 + $0x58] sm:$0xff]
    %v369 = vld [vmem:[#allocation7 + $0x60] sm:$0xff]
    %v370 = vld [vmem:[#allocation7 + $0x68] sm:$0xff]
    %v371 = vld [vmem:[#allocation7 + $0x70] sm:$0xff]
    %v372 = vld [vmem:[#allocation7 + $0x78] sm:$0xff]
    %v373 = vld [vmem:[#allocation7 + $0x80] sm:$0xff]
    %v374 = vld [vmem:[#allocation7 + $0x88] sm:$0xff]
    %v375 = vld [vmem:[#allocation7 + $0x90] sm:$0xff]
    %v376 = vld [vmem:[#allocation7 + $0x98] sm:$0xff]
    %v377 = vld [vmem:[#allocation7 + $0xa0] sm:$0xff]
    %v378 = vld [vmem:[#allocation7 + $0xa8] sm:$0xff]
    %v379 = vld [vmem:[#allocation7 + $0xb0] sm:$0xff]
    %v380 = vld [vmem:[#allocation7 + $0xb8] sm:$0xff]
    %v381 = vld [vmem:[#allocation7 + $0xc0] sm:$0xff]
    %v382 = vld [vmem:[#allocation7 + $0xc8] sm:$0xff]
    %v383 = vld [vmem:[#allocation7 + $0xd0] sm:$0xff]
    %v384 = vld [vmem:[#allocation7 + $0xd8] sm:$0xff]
    %v385 = vld [vmem:[#allocation7 + $0xe0] sm:$0xff]
    %v386 = vld [vmem:[#allocation7 + $0xe8] sm:$0xff]
    %v387 = vld [vmem:[#allocation7 + $0xf0] sm:$0xff]
    %v388 = vld [vmem:[#allocation7 + $0xf8] sm:$0xff]
    %v389 = vld [vmem:[#allocation7 + $0x100] sm:$0xff]
    %v390 = vld [vmem:[#allocation7 + $0x108] sm:$0xff]
    %v391 = vld [vmem:[#allocation7 + $0x110] sm:$0xff]
    %v392 = vld [vmem:[#allocation7 + $0x118] sm:$0xff]
    %v393 = vld [vmem:[#allocation7 + $0x120] sm:$0xff]
    %v394 = vld [vmem:[#allocation7 + $0x128] sm:$0xff]
    %v395 = vld [vmem:[#allocation7 + $0x130] sm:$0xff]
    %v396 = vld [vmem:[#allocation7 + $0x138] sm:$0xff]
    %v397 = vld [vmem:[#allocation7 + $0x140] sm:$0xff]
    %v398 = vld [vmem:[#allocation7 + $0x148] sm:$0xff]
    %v399 = vld [vmem:[#allocation7 + $0x150] sm:$0xff]
    %v400 = vld [vmem:[#allocation7 + $0x158] sm:$0xff]
    %v401 = vld [vmem:[#allocation7 + $0x160] sm:$0xff]
    %v402 = vld [vmem:[#allocation7 + $0x168] sm:$0xff]
    %v403 = vld [vmem:[#allocation7 + $0x170] sm:$0xff]
    %v404 = vld [vmem:[#allocation7 + $0x178] sm:$0xff]
    %405 = vmatpush.msra.mxu0 %v372
    %406 = vmatpush.msra.mxu0 %v371
    %407 = vmatpush.msra.mxu0 %v370
    %408 = vmatpush.msra.mxu0 %v369
    %409 = vmatpush.msra.mxu0 %v368
    %410 = vmatpush.msra.mxu0 %v367
    %411 = vmatpush.msra.mxu0 %v366
    %412 = vmatpush.msra.mxu0 %v365
    %413 = vmatpush.msra.mxu0 %v364
    %414 = vmatpush.msra.mxu0 %v363
    %415 = vmatpush.msra.mxu0 %v362
    %416 = vmatpush.msra.mxu0 %v361
    %417 = vmatpush.msra.mxu0 %v360
    %418 = vmatpush.msra.mxu0 %v359
    %419 = vmatpush.msra.mxu0 %v358
    %420 = vmatpush.msra.mxu0 %v357
    %421 = vmatmul.f32.gmra.mxu0 %v344
    %v422 = vpop.f32.mrf.mxu0
    %v423 = vadd.f32 0.0, %v422
    %424 = vmatmul.f32.gmra.mxu0 %v345
    %v425 = vpop.f32.mrf.mxu0
    %v426 = vadd.f32 0.0, %v425
    %427 = vmatmul.f32.gmra.mxu0 %v351
    %v428 = vpop.f32.mrf.mxu0
    %v429 = vadd.f32 0.0, %v428
    %430 = vmatmul.f32.gmra.mxu0 %v352
    %v431 = vpop.f32.mrf.mxu0
    %v432 = vadd.f32 0.0, %v431
    %433 = vdwg.mxu0
    %434 = vmatpush.msra.mxu0 %v388
    %435 = vmatpush.msra.mxu0 %v387
    %436 = vmatpush.msra.mxu0 %v386
    %437 = vmatpush.msra.mxu0 %v385
    %438 = vmatpush.msra.mxu0 %v384
    %439 = vmatpush.msra.mxu0 %v383
    %440 = vmatpush.msra.mxu0 %v382
    %441 = vmatpush.msra.mxu0 %v381
    %442 = vmatpush.msra.mxu0 %v380
    %443 = vmatpush.msra.mxu0 %v379
    %444 = vmatpush.msra.mxu0 %v378
    %445 = vmatpush.msra.mxu0 %v377
    %446 = vmatpush.msra.mxu0 %v376
    %447 = vmatpush.msra.mxu0 %v375
    %448 = vmatpush.msra.mxu0 %v374
    %449 = vmatpush.msra.mxu0 %v373
    %450 = vmatmul.f32.gmra.mxu0 %v346
    %v451 = vpop.f32.mrf.mxu0
    %v452 = vadd.f32 %v423, %v451
    %453 = vmatmul.f32.gmra.mxu0 %v347
    %v454 = vpop.f32.mrf.mxu0
    %v455 = vadd.f32 %v426, %v454
    %456 = vmatmul.f32.gmra.mxu0 %v353
    %v457 = vpop.f32.mrf.mxu0
    %v458 = vadd.f32 %v429, %v457
    %459 = vmatmul.f32.gmra.mxu0 %v354
    %v460 = vpop.f32.mrf.mxu0
    %v461 = vadd.f32 %v432, %v460
    %462 = vdwg.mxu0
    %463 = vmatpush.msra.mxu0 %v404
    %464 = vmatpush.msra.mxu0 %v403
    %465 = vmatpush.msra.mxu0 %v402
    %466 = vmatpush.msra.mxu0 %v401
    %467 = vmatpush.msra.mxu0 %v400
    %468 = vmatpush.msra.mxu0 %v399
    %469 = vmatpush.msra.mxu0 %v398
    %470 = vmatpush.msra.mxu0 %v397
    %471 = vmatpush.msra.mxu0 %v396
    %472 = vmatpush.msra.mxu0 %v395
    %473 = vmatpush.msra.mxu0 %v394
    %474 = vmatpush.msra.mxu0 %v393
    %475 = vmatpush.msra.mxu0 %v392
    %476 = vmatpush.msra.mxu0 %v391
    %477 = vmatpush.msra.mxu0 %v390
    %478 = vmatpush.msra.mxu0 %v389
    %479 = vmatmul.f32.gmra.mxu0 %v348
    %v480 = vpop.f32.mrf.mxu0
    %v481 = vadd.f32 %v452, %v480
    %482 = vmatmul.f32.gmra.mxu0 %v349
    %v483 = vpop.f32.mrf.mxu0
    %v484 = vadd.f32 %v455, %v483
    %485 = vmatmul.f32.gmra.mxu0 %v355
    %v486 = vpop.f32.mrf.mxu0
    %v487 = vadd.f32 %v458, %v486
    %488 = vmatmul.f32.gmra.mxu0 %v356
    %v489 = vpop.f32.mrf.mxu0
    %v490 = vadd.f32 %v461, %v489
    %491 = vdwg.mxu0
    %v492 = vld [vmem:[%s5] sm:$0x1]
    %v493 = vld [vmem:[%s6] sm:$0x1]
    %v494 = vadd.f32 %v481, %v484
    %v495 = vadd.f32 %v494, %v487
    %v496 = vadd.f32 %v495, %v490
    %v497 = vrot.slane %v496, 4
    %v498 = vadd.f32 %v496, %v497
    %v499 = vrot.slane %v498, 2
    %v500 = vadd.f32 %v498, %v499
    %v501 = vrot.slane %v500, 1
    %v502 = vadd.f32 %v500, %v501
    %v503 = vmul.f32 %v481, %v481
    %v504 = vmul.f32 %v484, %v484
    %v505 = vmul.f32 %v487, %v487
    %v506 = vmul.f32 %v490, %v490
    %v507 = vadd.f32 %v503, %v504
    %v508 = vadd.f32 %v507, %v505
    %v509 = vadd.f32 %v508, %v506
    %v510 = vrot.slane %v509, 4
    %v511 = vadd.f32 %v509, %v510
    %v512 = vrot.slane %v511, 2
    %v513 = vadd.f32 %v511, %v512
    %v514 = vrot.slane %v513, 1
    %v515 = vadd.f32 %v513, %v514
    %v516 = vsel %vm230, %v502, %v515
    %v517 = vld [vmem:[%s7] sm:$0xff]
    %v518 = vld [vmem:[%s7 + $0x8] sm:$0xff]
    %v519 = vld [vmem:[%s7 + $0x10] sm:$0xff]
    %v520 = vld [vmem:[%s7 + $0x18] sm:$0xff]
    %v521 = vld [vmem:[%s7 + $0x20] sm:$0xff]
    %v522 = vld [vmem:[%s7 + $0x28] sm:$0xff]
    %v523 = vld [vmem:[%s7 + $0x30] sm:$0xff]
    %v524 = vld [vmem:[%s7 + $0x38] sm:$0xff]
    %v525 = vld [vmem:[%s7 + $0x40] sm:$0xff]
    %v526 = vld [vmem:[%s7 + $0x48] sm:$0xff]
    %v527 = vld [vmem:[%s7 + $0x50] sm:$0xff]
    %v528 = vld [vmem:[%s7 + $0x58] sm:$0xff]
    %v529 = vld [vmem:[%s7 + $0x60] sm:$0xff]
    %v530 = vld [vmem:[%s7 + $0x68] sm:$0xff]
    %v531 = vld [vmem:[%s7 + $0x70] sm:$0xff]
    %v532 = vld [vmem:[%s7 + $0x78] sm:$0xff]
    %533 = vmatpush.msra.mxu0 %v532
    %534 = vmatpush.msra.mxu0 %v531
    %535 = vmatpush.msra.mxu0 %v530
    %536 = vmatpush.msra.mxu0 %v529
    %537 = vmatpush.msra.mxu0 %v528
    %538 = vmatpush.msra.mxu0 %v527
    %539 = vmatpush.msra.mxu0 %v526
    %540 = vmatpush.msra.mxu0 %v525
    %541 = vmatpush.msra.mxu0 %v524
    %542 = vmatpush.msra.mxu0 %v523
    %543 = vmatpush.msra.mxu0 %v522
    %544 = vmatpush.msra.mxu0 %v521
    %545 = vmatpush.msra.mxu0 %v520
    %546 = vmatpush.msra.mxu0 %v519
    %547 = vmatpush.msra.mxu0 %v518
    %548 = vmatpush.msra.mxu0 %v517
    %549 = vmatmul.f32.gmra.mxu0 %v516
    %v550 = vpop.f32.mrf.mxu0
    %v551 = vadd.f32 0.0, %v550
    %552 = vdwg.mxu0
    %v553 = vmul.f32 %v551, 0.001953125
    %v554 = vmul.f32 %v553, %v553
    %v556 = vrot.slane %v554, 7
    %v558 = vsub.f32 %v553, %v556
    %v559 = vadd.f32 %v558, 1e-05
    %v560 = vrsqrt.pop %v559
    %v561 = vmul.f32 %v560, %v559
    %v562 = vmul.f32 %v561, %v560
    %v563 = vmul.f32 0.5, %v562
    %v564 = vsub.f32 1.5, %v563
    %v565 = vmul.f32 %v560, %v564
    %vm566 = vweird.f32 %v559
    %vm567 = vweird.f32 %v560
    %vm568 = vmor %vm566, %vm567
    %v569 = vsel %vm568, %v560, %v565
    %571 = vst [vmem:[#allocation1] sm:$0xff] %v569
    %s572 = scalar_lea.vmem [#allocation1], 1
    %v573 = vld [vmem:[%s572] ss:$9 sm:$0xff]
    %v575 = vmul.f32 %v492, %v573
    %v576 = vmul.f32 %v553, %v575
    %v577 = vsub.f32 %v493, %v576
    %v579 = vperm.slane %v577, 0
    %v581 = vsel %vm230, %v575, %v579
    %v582 = vld [vmem:[%s8] sm:$0xff]
    %v584 = vsel %vm298, %v581, 0
    %586 = vmatpush.msra.mxu0 0.0
    %587 = vmatpush.msra.mxu0 0.0
    %588 = vmatpush.msra.mxu0 0.0
    %589 = vmatpush.msra.mxu0 0.0
    %590 = vmatpush.msra.mxu0 0.0
    %591 = vmatpush.msra.mxu0 0.0
    %592 = vmatpush.msra.mxu0 0.0
    %593 = vmatpush.msra.mxu0 0.0
    %594 = vmatpush.msra.mxu0 0.0
    %595 = vmatpush.msra.mxu0 0.0
    %596 = vmatpush.msra.mxu0 0.0
    %597 = vmatpush.msra.mxu0 0.0
    %598 = vmatpush.msra.mxu0 0.0
    %599 = vmatpush.msra.mxu0 0.0
    %600 = vmatpush.msra.mxu0 0.0
    %601 = vmatpush.msra.mxu0 %v582
    %602 = vmatmul.f32.gmra.mxu0 %v584
    %v603 = vpop.f32.mrf.mxu0
    %v604 = vadd.f32 0.0, %v603
    %605 = vdwg.mxu0
    %v606 = vperm.slane %v604, 0
    %v607 = vmul.f32 %v481, %v606
    %v608 = vmul.f32 %v484, %v606
    %v609 = vmul.f32 %v487, %v606
    %v610 = vmul.f32 %v490, %v606
    %v611 = vperm.slane %v604, 1
    %v612 = vadd.f32 %v607, %v611
    %v613 = vadd.f32 %v608, %v611
    %v614 = vadd.f32 %v609, %v611
    %v615 = vadd.f32 %v610, %v611
    %v616 = vmax.f32 %v612, 0.0
    %v617 = vmax.f32 %v613, 0.0
    %v618 = vmax.f32 %v614, 0.0
    %v619 = vmax.f32 %v615, 0.0
    %620 = vst [vmem:[#allocation9] sm:$0xff] %v616
    %621 = vst [vmem:[#allocation9 + $0x8] sm:$0xff] %v617
    %622 = vst [vmem:[#allocation9 + $0x10] sm:$0xff] %v618
    %623 = vst [vmem:[#allocation9 + $0x18] sm:$0xff] %v619
    // Predicated region
    $region46: #{tpu_custom_call.1} parent=1 // pred_check
      _
    $region47: #{tpu_custom_call.1} parent=1 // pred_check_branch
      %625 = sbr.rel (0) target = $region49
    $region48: #{tpu_custom_call.1} parent=1 // pred_region
      %627 = vsyncadd [#allocation6], 0
      %s628 = sshll.u32 [#allocation9], 4
      %s629 = int_to_ptr.vmem [resolvable:$true] %s628
      %s630 = sshll.u32 %s9, 4
      %s631 = int_to_ptr.hbm [resolvable:$true] %s630
      %636 = dma.vmem_to_hbm [thread:$0]  %s629, 512, %s631, [#allocation6], 128, 128, 8
    $region49: #{tpu_custom_call.1} parent=1 // pred_fallthru
      _
    // Predicated region
    $region50: #{tpu_custom_call.1} parent=1 // pred_check
      _
    $region51: #{tpu_custom_call.1} parent=1 // pred_check_branch
      %638 = sbr.rel (0) target = $region53
    $region52: #{tpu_custom_call.1} parent=1 // pred_region
      %640 = dma.done [#allocation6], 512
    $region53: #{tpu_custom_call.1} parent=1 // pred_fallthru
      _
    %641 = vsyncpa [#allocation5], 1
    %642 = vsyncpa [#allocation8], 1
    %643 = vsyncpa [#allocation6], 1

</llo_original>
